<compile_context>
chip_gen: v7x
topology: tpu7x:2x2x1
jax: 0.10.0
libtpu: 0.0.40
codegen_flags: <defaults>
</compile_context>

<pallas_src>
import functools

import jax
import jax.numpy as jnp
from jax import lax
from jax.experimental import pallas as pl
from jax.experimental.pallas import tpu as pltpu


def _round_up(x, m):
    return (x + m - 1) // m * m


def lstm_chunk_kernel(x_ref, wih_ref, whh_ref, y_ref, cn_ref,
                      gx_scr, h_scr, c_scr, *, seq_len, needs_mask):
    # x_ref:   (TT, Bp, I)   bf16   chunk of inputs (time-major), streamed/pipelined
    # wih_ref: (I, 4*Hp)     bf16   fused input->gates weights, VMEM resident
    # whh_ref: (Hp, 4*Hp)    bf16   fused hidden->gates weights, VMEM resident
    # y_ref:   (TT, Bp, Hp)  f32    h_t outputs for this chunk (pipelined writeback)
    # cn_ref:  (Bp, Hp)      f32    final cell state (written at the last chunk)
    # gx_scr:  (TT, Bp, 4Hp) f32    whole-chunk input pre-activations
    # h_scr/c_scr: (Bp, Hp)  f32    recurrent state carried across grid steps
    chunk = pl.program_id(0)
    n_chunks = pl.num_programs(0)
    TT, Bp, I = x_ref.shape
    Hp = cn_ref.shape[-1]

    @pl.when(chunk == 0)
    def _():
        h_scr[...] = jnp.zeros_like(h_scr)
        c_scr[...] = jnp.zeros_like(c_scr)

    # Whole-chunk input projection: ONE (TT*Bp, I) @ (I, 4Hp) MXU matmul
    # (bf16 operands, f32 accumulation), instead of TT tiny per-step matmuls.
    gx_scr[...] = jnp.dot(
        x_ref[...].reshape(TT * Bp, I), wih_ref[...],
        preferred_element_type=jnp.float32).reshape(TT, Bp, 4 * Hp)

    whh = whh_ref[...]

    def step(t_local, carry):
        h_prev = h_scr[...]                       # f32
        c_prev = c_scr[...]                       # f32

        # Fused (Bp, 4Hp) gate pre-activation: hoisted input projection + one
        # recurrent MXU matmul. Gate blocks (i, f, g, o) are 128-lane aligned.
        gates = gx_scr[t_local] + jnp.dot(
            h_prev.astype(whh.dtype), whh, preferred_element_type=jnp.float32)

        i_g = jax.nn.sigmoid(gates[:, 0 * Hp:1 * Hp])
        f_g = jax.nn.sigmoid(gates[:, 1 * Hp:2 * Hp])
        g_g = jnp.tanh(gates[:, 2 * Hp:3 * Hp])
        o_g = jax.nn.sigmoid(gates[:, 3 * Hp:4 * Hp])

        c = f_g * c_prev + i_g * g_g
        h = o_g * jnp.tanh(c)

        if needs_mask:  # only compiled when T was padded up to a multiple of TT
            valid = (chunk * TT + t_local) < seq_len
            h = jnp.where(valid, h, h_prev)
            c = jnp.where(valid, c, c_prev)

        h_scr[...] = h
        c_scr[...] = c
        y_ref[t_local] = h.astype(y_ref.dtype)
        return carry

    lax.fori_loop(0, TT, step, 0, unroll=True)

    @pl.when(chunk == n_chunks - 1)
    def _():
        cn_ref[...] = c_scr[...]


def lstm_forward(x, w_ih, w_hh, *, mxu_dtype=jnp.bfloat16, max_chunk=8):
    """nn.LSTM(batch_first=True, bias=False, num_layers=1) forward.

    x:    (B, T, I)  float32, batch_first
    w_ih: (4H, I)    PyTorch weight_ih_l0, gate order i, f, g, o
    w_hh: (4H, H)    PyTorch weight_hh_l0
    Returns (output (B, T, H), (h_n (1, B, H), c_n (1, B, H))).
    """
    B, T, I = x.shape
    H = w_hh.shape[-1]

    Bp = _round_up(B, 8)                     # sublane-aligned batch
    Hp = _round_up(max(H, 1), 128)           # gate blocks lane-aligned, lane-dense stores
    GH = 4 * Hp
    TT = max(1, min(max_chunk, T))           # timesteps per grid step
    Tp = _round_up(T, TT)

    # ---- fuse + pad weights: gate block k occupies lanes [k*Hp, k*Hp + H) ----
    wih_g = jnp.pad(w_ih.reshape(4, H, I), ((0, 0), (0, Hp - H), (0, 0)))        # (4, Hp, I)
    whh_g = jnp.pad(w_hh.reshape(4, H, H), ((0, 0), (0, Hp - H), (0, Hp - H)))   # (4, Hp, Hp)
    w_ih_f = jnp.transpose(wih_g, (2, 0, 1)).reshape(I, GH).astype(mxu_dtype)    # (I, 4Hp)
    w_hh_f = jnp.transpose(whh_g, (2, 0, 1)).reshape(Hp, GH).astype(mxu_dtype)   # (Hp, 4Hp)

    # ---- time-major, padded, bf16 input stream (projection is fused into the kernel,
    #      so no (T, Bp, 4Hp) f32 pre-activation ever touches HBM) ----
    x_pad = jnp.pad(x, ((0, Bp - B), (0, Tp - T), (0, 0)))                       # (Bp, Tp, I)
    x_tm = jnp.transpose(x_pad, (1, 0, 2)).astype(mxu_dtype)                     # (Tp, Bp, I)

    # ---- explicit VMEM budget (resident weights + double-buffered x/y + scratch) ----
    bb, bf = 2, 4
    vmem_needed = (2 * (I * GH + Hp * GH) * bb        # resident weights (worst case 2 bufs)
                   + 2 * TT * Bp * I * bb             # x stream, double-buffered
                   + 2 * TT * Bp * Hp * bf            # y writeback, double-buffered
                   + 2 * Bp * Hp * bf                 # c_n output
                   + TT * Bp * GH * bf                # gx scratch
                   + 2 * Bp * Hp * bf)                # h/c scratch
    vmem_limit = int(min(100 * 2**20, max(2 * vmem_needed, 16 * 2**20)))

    kernel = functools.partial(lstm_chunk_kernel, seq_len=T, needs_mask=(Tp != T))

    y, c_n = pl.pallas_call(
        kernel,
        grid=(Tp // TT,),
        in_specs=[
            pl.BlockSpec((TT, Bp, I), lambda c: (c, 0, 0)),   # x chunk (pipelined)
            pl.BlockSpec((I, GH), lambda c: (0, 0)),          # W_ih resident
            pl.BlockSpec((Hp, GH), lambda c: (0, 0)),         # W_hh resident
        ],
        out_specs=(
            pl.BlockSpec((TT, Bp, Hp), lambda c: (c, 0, 0)),  # y chunk (pipelined writeback)
            pl.BlockSpec((Bp, Hp), lambda c: (0, 0)),         # c_n
        ),
        out_shape=(
            jax.ShapeDtypeStruct((Tp, Bp, Hp), jnp.float32),
            jax.ShapeDtypeStruct((Bp, Hp), jnp.float32),
        ),
        scratch_shapes=[
            pltpu.VMEM((TT, Bp, GH), jnp.float32),            # chunk pre-activations
            pltpu.VMEM((Bp, Hp), jnp.float32),                # h carry
            pltpu.VMEM((Bp, Hp), jnp.float32),                # c carry
        ],
        compiler_params=pltpu.CompilerParams(
            dimension_semantics=("arbitrary",),               # time axis is sequential
            vmem_limit_bytes=vmem_limit),
    )(x_tm, w_ih_f, w_hh_f)

    output = jnp.transpose(y[:T, :B, :H], (1, 0, 2))          # (B, T, H), batch_first
    h_n = y[T - 1, :B, :H][None]                              # h_n == y[:, -1]
    c_n = c_n[:B, :H][None]
    return output, (h_n, c_n)


def reference_lstm(x, w_ih, w_hh, mxu_dtype=jnp.float32):
    """Pure-JAX reference of the same recurrence.

    With mxu_dtype=bf16 it mirrors the kernel's matmul precision (bf16 operands,
    f32 accumulation, f32 elementwise); with f32 it is the exact PyTorch semantics.
    """
    B, T, _ = x.shape
    H = w_hh.shape[-1]
    Wih = w_ih.T.astype(mxu_dtype)   # (I, 4H), gates i,f,g,o along last axis
    Whh = w_hh.T.astype(mxu_dtype)   # (H, 4H)
    h = jnp.zeros((B, H), jnp.float32)
    c = jnp.zeros((B, H), jnp.float32)
    ys = []
    for t in range(T):
        x_t = x[:, t, :].astype(mxu_dtype)
        g = (jnp.dot(x_t, Wih, preferred_element_type=jnp.float32)
             + jnp.dot(h.astype(mxu_dtype), Whh, preferred_element_type=jnp.float32))
        i_g = jax.nn.sigmoid(g[:, 0 * H:1 * H])
        f_g = jax.nn.sigmoid(g[:, 1 * H:2 * H])
        g_g = jnp.tanh(g[:, 2 * H:3 * H])
        o_g = jax.nn.sigmoid(g[:, 3 * H:4 * H])
        c = f_g * c + i_g * g_g
        h = o_g * jnp.tanh(c)
        ys.append(h)
    return jnp.stack(ys, axis=1), (h[None], c[None])


if __name__ == "__main__":
    hidden_size = 4
    # input_x from the module: batch=1, seq_len=3, input_size=3
    x = jnp.asarray([[[1., 2., 3.], [4., 5., 6.], [7., 8., 9.]]], dtype=jnp.float32)
    B, T, I = x.shape
    H = hidden_size

    # Deterministic weights in PyTorch layout: (4H, I) / (4H, H), U(-1/sqrt(H), 1/sqrt(H)), bias=False.
    key = jax.random.PRNGKey(0)
    k1, k2 = jax.random.split(key)
    bound = 1.0 / (H ** 0.5)
    w_ih = jax.random.uniform(k1, (4 * H, I), jnp.float32, -bound, bound)
    w_hh = jax.random.uniform(k2, (4 * H, H), jnp.float32, -bound, bound)

    fwd = jax.jit(lstm_forward, static_argnames=("mxu_dtype", "max_chunk"))
    out, (h_n, c_n) = fwd(x, w_ih, w_hh)
    jax.block_until_ready((out, h_n, c_n))

    assert out.shape == (B, T, H) and h_n.shape == (1, B, H) and c_n.shape == (1, B, H)

    # Matched-precision reference (bf16 MXU operands, f32 accumulate/elementwise).
    ref_out, (ref_h, ref_c) = reference_lstm(x, w_ih, w_hh, mxu_dtype=jnp.bfloat16)
    assert jnp.allclose(out, ref_out, atol=1e-3), float(jnp.max(jnp.abs(out - ref_out)))
    assert jnp.allclose(h_n, ref_h, atol=1e-3)
    assert jnp.allclose(c_n, ref_c, atol=1e-3)

    # Full-f32 (PyTorch-exact) reference: difference bounded by bf16 quantization error.
    f32_out, (f32_h, f32_c) = reference_lstm(x, w_ih, w_hh, mxu_dtype=jnp.float32)
    assert jnp.allclose(out, f32_out, atol=5e-2)
    assert jnp.allclose(h_n, f32_h, atol=5e-2)
    assert jnp.allclose(c_n, f32_c, atol=5e-2)

    print("KERNEL_OK")
</pallas_src>

<mosaic_0001>
module attributes {stable_mosaic.version = 11 : i64} {
  func.func @lstm_chunk_kernel(%arg0: i32, %arg1: memref<3x8x3xbf16, #tpu.memory_space<vmem>>, %arg2: memref<3x512xbf16, #tpu.memory_space<vmem>>, %arg3: memref<128x512xbf16, #tpu.memory_space<vmem>>, %arg4: memref<3x8x128xf32, #tpu.memory_space<vmem>>, %arg5: memref<8x128xf32, #tpu.memory_space<vmem>>, %arg6: memref<3x8x512xf32, #tpu.memory_space<vmem>>, %arg7: memref<8x128xf32, #tpu.memory_space<vmem>>, %arg8: memref<8x128xf32, #tpu.memory_space<vmem>>) attributes {dimension_semantics = [#tpu.dimension_semantics<arbitrary>], iteration_bounds = array<i64: 1>, scalar_prefetch = 0 : i64, scratch_operands = 3 : i64, tpu.core_type = #tpu.core_type<tc>, window_params = [{transform_indices = @transform_0, window_bounds = array<i64: 3, 8, 3>}, {pipeline_mode = #tpu.pipeline_mode<synchronous>, transform_indices = @transform_1, window_bounds = array<i64: 3, 512>}, {pipeline_mode = #tpu.pipeline_mode<synchronous>, transform_indices = @transform_2, window_bounds = array<i64: 128, 512>}, {transform_indices = @transform_3, window_bounds = array<i64: 3, 8, 128>}, {pipeline_mode = #tpu.pipeline_mode<synchronous>, transform_indices = @transform_4, window_bounds = array<i64: 8, 128>}]} {
    %c0_i32 = arith.constant 0 : i32
    %0 = arith.cmpi eq, %arg0, %c0_i32 : i32
    %1 = arith.extui %0 : i1 to i32
    %c0_i32_0 = arith.constant 0 : i32
    %2 = arith.cmpi ne, %1, %c0_i32_0 : i32
    scf.if %2 {
      %cst_61 = arith.constant 0.000000e+00 : f32
      %130 = vector.broadcast %cst_61 : f32 to vector<8x128xf32>
      %c0_62 = arith.constant 0 : index
      %c0_63 = arith.constant 0 : index
      %131 = vector.load %arg7[%c0_62, %c0_63] : memref<8x128xf32, #tpu.memory_space<vmem>>, vector<8x128xf32>
      tpu.vector_store %arg7[%c0_62, %c0_63], %130 {strides = array<i32>} : memref<8x128xf32, #tpu.memory_space<vmem>>, vector<8x128xf32>,
      %cst_64 = arith.constant 0.000000e+00 : f32
      %132 = vector.broadcast %cst_64 : f32 to vector<8x128xf32>
      %c0_65 = arith.constant 0 : index
      %c0_66 = arith.constant 0 : index
      %133 = vector.load %arg8[%c0_65, %c0_66] : memref<8x128xf32, #tpu.memory_space<vmem>>, vector<8x128xf32>
      tpu.vector_store %arg8[%c0_65, %c0_66], %132 {strides = array<i32>} : memref<8x128xf32, #tpu.memory_space<vmem>>, vector<8x128xf32>,
    } else {
    }
    %c0 = arith.constant 0 : index
    %c0_1 = arith.constant 0 : index
    %c0_2 = arith.constant 0 : index
    %3 = vector.load %arg1[%c0, %c0_1, %c0_2] : memref<3x8x3xbf16, #tpu.memory_space<vmem>>, vector<3x8x3xbf16>
    %4 = vector.shape_cast %3 : vector<3x8x3xbf16> to vector<24x3xbf16>
    %c0_3 = arith.constant 0 : index
    %c0_4 = arith.constant 0 : index
    %5 = vector.load %arg2[%c0_3, %c0_4] : memref<3x512xbf16, #tpu.memory_space<vmem>>, vector<3x512xbf16>
    %cst = arith.constant dense<0.000000e+00> : vector<24x512xf32>
    %6 = tpu.matmul %4, %5, %cst {dimension_numbers = #tpu.dot_dimension_numbers<[1], [0], [0], [1], [0, 0, 1, 1], [], []>} : vector<24x3xbf16>, vector<3x512xbf16>, vector<24x512xf32> -> vector<24x512xf32>
    %7 = vector.shape_cast %6 : vector<24x512xf32> to vector<3x8x512xf32>
    %c0_5 = arith.constant 0 : index
    %c0_6 = arith.constant 0 : index
    %c0_7 = arith.constant 0 : index
    %8 = vector.load %arg6[%c0_5, %c0_6, %c0_7] : memref<3x8x512xf32, #tpu.memory_space<vmem>>, vector<3x8x512xf32>
    tpu.vector_store %arg6[%c0_5, %c0_6, %c0_7], %7 {strides = array<i32>} : memref<3x8x512xf32, #tpu.memory_space<vmem>>, vector<3x8x512xf32>,
    %c0_8 = arith.constant 0 : index
    %c0_9 = arith.constant 0 : index
    %9 = vector.load %arg3[%c0_8, %c0_9] : memref<128x512xbf16, #tpu.memory_space<vmem>>, vector<128x512xbf16>
    %c0_i32_10 = arith.constant 0 : i32
    %c0_11 = arith.constant 0 : index
    %c0_12 = arith.constant 0 : index
    %10 = vector.load %arg7[%c0_11, %c0_12] : memref<8x128xf32, #tpu.memory_space<vmem>>, vector<8x128xf32>
    %c0_13 = arith.constant 0 : index
    %c0_14 = arith.constant 0 : index
    %11 = vector.load %arg8[%c0_13, %c0_14] : memref<8x128xf32, #tpu.memory_space<vmem>>, vector<8x128xf32>
    %12 = arith.index_cast %c0_i32_10 : i32 to index
    %c0_15 = arith.constant 0 : index
    %c0_16 = arith.constant 0 : index
    %13 = vector.load %arg6[%12, %c0_15, %c0_16] : memref<3x8x512xf32, #tpu.memory_space<vmem>>, vector<1x8x512xf32>
    %14 = vector.shape_cast %13 : vector<1x8x512xf32> to vector<8x512xf32>
    %15 = arith.truncf %10 : vector<8x128xf32> to vector<8x128xbf16>
    %cst_17 = arith.constant dense<0.000000e+00> : vector<8x512xf32>
    %16 = tpu.matmul %15, %9, %cst_17 {dimension_numbers = #tpu.dot_dimension_numbers<[1], [0], [0], [1], [0, 0, 1, 1], [], []>} : vector<8x128xbf16>, vector<128x512xbf16>, vector<8x512xf32> -> vector<8x512xf32>
    %17 = arith.addf %14, %16 : vector<8x512xf32>
    %18 = vector.extract_strided_slice %17 {offsets = [0, 0], sizes = [8, 128], strides = [1, 1]} : vector<8x512xf32> to vector<8x128xf32>
    %19 = arith.negf %18 : vector<8x128xf32>
    %20 = math.exp %19 : vector<8x128xf32>
    %cst_18 = arith.constant 1.000000e+00 : f32
    %21 = vector.broadcast %cst_18 : f32 to vector<8x128xf32>
    %22 = arith.addf %21, %20 : vector<8x128xf32>
    %23 = arith.divf %21, %22 : vector<8x128xf32>
    %24 = vector.extract_strided_slice %17 {offsets = [0, 128], sizes = [8, 128], strides = [1, 1]} : vector<8x512xf32> to vector<8x128xf32>
    %25 = arith.negf %24 : vector<8x128xf32>
    %26 = math.exp %25 : vector<8x128xf32>
    %cst_19 = arith.constant 1.000000e+00 : f32
    %27 = vector.broadcast %cst_19 : f32 to vector<8x128xf32>
    %28 = arith.addf %27, %26 : vector<8x128xf32>
    %29 = arith.divf %27, %28 : vector<8x128xf32>
    %30 = vector.extract_strided_slice %17 {offsets = [0, 256], sizes = [8, 128], strides = [1, 1]} : vector<8x512xf32> to vector<8x128xf32>
    %31 = math.tanh %30 : vector<8x128xf32>
    %32 = vector.extract_strided_slice %17 {offsets = [0, 384], sizes = [8, 128], strides = [1, 1]} : vector<8x512xf32> to vector<8x128xf32>
    %33 = arith.negf %32 : vector<8x128xf32>
    %34 = math.exp %33 : vector<8x128xf32>
    %cst_20 = arith.constant 1.000000e+00 : f32
    %35 = vector.broadcast %cst_20 : f32 to vector<8x128xf32>
    %36 = arith.addf %35, %34 : vector<8x128xf32>
    %37 = arith.divf %35, %36 : vector<8x128xf32>
    %38 = arith.mulf %29, %11 : vector<8x128xf32>
    %39 = arith.mulf %23, %31 : vector<8x128xf32>
    %40 = arith.addf %38, %39 : vector<8x128xf32>
    %41 = math.tanh %40 : vector<8x128xf32>
    %42 = arith.mulf %37, %41 : vector<8x128xf32>
    %c0_21 = arith.constant 0 : index
    %c0_22 = arith.constant 0 : index
    %43 = vector.load %arg7[%c0_21, %c0_22] : memref<8x128xf32, #tpu.memory_space<vmem>>, vector<8x128xf32>
    tpu.vector_store %arg7[%c0_21, %c0_22], %42 {strides = array<i32>} : memref<8x128xf32, #tpu.memory_space<vmem>>, vector<8x128xf32>,
    %c0_23 = arith.constant 0 : index
    %c0_24 = arith.constant 0 : index
    %44 = vector.load %arg8[%c0_23, %c0_24] : memref<8x128xf32, #tpu.memory_space<vmem>>, vector<8x128xf32>
    tpu.vector_store %arg8[%c0_23, %c0_24], %40 {strides = array<i32>} : memref<8x128xf32, #tpu.memory_space<vmem>>, vector<8x128xf32>,
    %45 = arith.index_cast %c0_i32_10 : i32 to index
    %c0_25 = arith.constant 0 : index
    %c0_26 = arith.constant 0 : index
    %46 = vector.load %arg4[%45, %c0_25, %c0_26] : memref<3x8x128xf32, #tpu.memory_space<vmem>>, vector<1x8x128xf32>
    %47 = vector.shape_cast %46 : vector<1x8x128xf32> to vector<8x128xf32>
    %48 = vector.shape_cast %42 : vector<8x128xf32> to vector<1x8x128xf32>
    tpu.vector_store %arg4[%45, %c0_25, %c0_26], %48 {strides = array<i32>} : memref<3x8x128xf32, #tpu.memory_space<vmem>>, vector<1x8x128xf32>,
    %c1_i32 = arith.constant 1 : i32
    %c0_27 = arith.constant 0 : index
    %c0_28 = arith.constant 0 : index
    %49 = vector.load %arg7[%c0_27, %c0_28] : memref<8x128xf32, #tpu.memory_space<vmem>>, vector<8x128xf32>
    %c0_29 = arith.constant 0 : index
    %c0_30 = arith.constant 0 : index
    %50 = vector.load %arg8[%c0_29, %c0_30] : memref<8x128xf32, #tpu.memory_space<vmem>>, vector<8x128xf32>
    %51 = arith.index_cast %c1_i32 : i32 to index
    %c0_31 = arith.constant 0 : index
    %c0_32 = arith.constant 0 : index
    %52 = vector.load %arg6[%51, %c0_31, %c0_32] : memref<3x8x512xf32, #tpu.memory_space<vmem>>, vector<1x8x512xf32>
    %53 = vector.shape_cast %52 : vector<1x8x512xf32> to vector<8x512xf32>
    %54 = arith.truncf %49 : vector<8x128xf32> to vector<8x128xbf16>
    %cst_33 = arith.constant dense<0.000000e+00> : vector<8x512xf32>
    %55 = tpu.matmul %54, %9, %cst_33 {dimension_numbers = #tpu.dot_dimension_numbers<[1], [0], [0], [1], [0, 0, 1, 1], [], []>} : vector<8x128xbf16>, vector<128x512xbf16>, vector<8x512xf32> -> vector<8x512xf32>
    %56 = arith.addf %53, %55 : vector<8x512xf32>
    %57 = vector.extract_strided_slice %56 {offsets = [0, 0], sizes = [8, 128], strides = [1, 1]} : vector<8x512xf32> to vector<8x128xf32>
    %58 = arith.negf %57 : vector<8x128xf32>
    %59 = math.exp %58 : vector<8x128xf32>
    %cst_34 = arith.constant 1.000000e+00 : f32
    %60 = vector.broadcast %cst_34 : f32 to vector<8x128xf32>
    %61 = arith.addf %60, %59 : vector<8x128xf32>
    %62 = arith.divf %60, %61 : vector<8x128xf32>
    %63 = vector.extract_strided_slice %56 {offsets = [0, 128], sizes = [8, 128], strides = [1, 1]} : vector<8x512xf32> to vector<8x128xf32>
    %64 = arith.negf %63 : vector<8x128xf32>
    %65 = math.exp %64 : vector<8x128xf32>
    %cst_35 = arith.constant 1.000000e+00 : f32
    %66 = vector.broadcast %cst_35 : f32 to vector<8x128xf32>
    %67 = arith.addf %66, %65 : vector<8x128xf32>
    %68 = arith.divf %66, %67 : vector<8x128xf32>
    %69 = vector.extract_strided_slice %56 {offsets = [0, 256], sizes = [8, 128], strides = [1, 1]} : vector<8x512xf32> to vector<8x128xf32>
    %70 = math.tanh %69 : vector<8x128xf32>
    %71 = vector.extract_strided_slice %56 {offsets = [0, 384], sizes = [8, 128], strides = [1, 1]} : vector<8x512xf32> to vector<8x128xf32>
    %72 = arith.negf %71 : vector<8x128xf32>
    %73 = math.exp %72 : vector<8x128xf32>
    %cst_36 = arith.constant 1.000000e+00 : f32
    %74 = vector.broadcast %cst_36 : f32 to vector<8x128xf32>
    %75 = arith.addf %74, %73 : vector<8x128xf32>
    %76 = arith.divf %74, %75 : vector<8x128xf32>
    %77 = arith.mulf %68, %50 : vector<8x128xf32>
    %78 = arith.mulf %62, %70 : vector<8x128xf32>
    %79 = arith.addf %77, %78 : vector<8x128xf32>
    %80 = math.tanh %79 : vector<8x128xf32>
    %81 = arith.mulf %76, %80 : vector<8x128xf32>
    %c0_37 = arith.constant 0 : index
    %c0_38 = arith.constant 0 : index
    %82 = vector.load %arg7[%c0_37, %c0_38] : memref<8x128xf32, #tpu.memory_space<vmem>>, vector<8x128xf32>
    tpu.vector_store %arg7[%c0_37, %c0_38], %81 {strides = array<i32>} : memref<8x128xf32, #tpu.memory_space<vmem>>, vector<8x128xf32>,
    %c0_39 = arith.constant 0 : index
    %c0_40 = arith.constant 0 : index
    %83 = vector.load %arg8[%c0_39, %c0_40] : memref<8x128xf32, #tpu.memory_space<vmem>>, vector<8x128xf32>
    tpu.vector_store %arg8[%c0_39, %c0_40], %79 {strides = array<i32>} : memref<8x128xf32, #tpu.memory_space<vmem>>, vector<8x128xf32>,
    %84 = arith.index_cast %c1_i32 : i32 to index
    %c0_41 = arith.constant 0 : index
    %c0_42 = arith.constant 0 : index
    %85 = vector.load %arg4[%84, %c0_41, %c0_42] : memref<3x8x128xf32, #tpu.memory_space<vmem>>, vector<1x8x128xf32>
    %86 = vector.shape_cast %85 : vector<1x8x128xf32> to vector<8x128xf32>
    %87 = vector.shape_cast %81 : vector<8x128xf32> to vector<1x8x128xf32>
    tpu.vector_store %arg4[%84, %c0_41, %c0_42], %87 {strides = array<i32>} : memref<3x8x128xf32, #tpu.memory_space<vmem>>, vector<1x8x128xf32>,
    %c2_i32 = arith.constant 2 : i32
    %c0_43 = arith.constant 0 : index
    %c0_44 = arith.constant 0 : index
    %88 = vector.load %arg7[%c0_43, %c0_44] : memref<8x128xf32, #tpu.memory_space<vmem>>, vector<8x128xf32>
    %c0_45 = arith.constant 0 : index
    %c0_46 = arith.constant 0 : index
    %89 = vector.load %arg8[%c0_45, %c0_46] : memref<8x128xf32, #tpu.memory_space<vmem>>, vector<8x128xf32>
    %90 = arith.index_cast %c2_i32 : i32 to index
    %c0_47 = arith.constant 0 : index
    %c0_48 = arith.constant 0 : index
    %91 = vector.load %arg6[%90, %c0_47, %c0_48] : memref<3x8x512xf32, #tpu.memory_space<vmem>>, vector<1x8x512xf32>
    %92 = vector.shape_cast %91 : vector<1x8x512xf32> to vector<8x512xf32>
    %93 = arith.truncf %88 : vector<8x128xf32> to vector<8x128xbf16>
    %cst_49 = arith.constant dense<0.000000e+00> : vector<8x512xf32>
    %94 = tpu.matmul %93, %9, %cst_49 {dimension_numbers = #tpu.dot_dimension_numbers<[1], [0], [0], [1], [0, 0, 1, 1], [], []>} : vector<8x128xbf16>, vector<128x512xbf16>, vector<8x512xf32> -> vector<8x512xf32>
    %95 = arith.addf %92, %94 : vector<8x512xf32>
    %96 = vector.extract_strided_slice %95 {offsets = [0, 0], sizes = [8, 128], strides = [1, 1]} : vector<8x512xf32> to vector<8x128xf32>
    %97 = arith.negf %96 : vector<8x128xf32>
    %98 = math.exp %97 : vector<8x128xf32>
    %cst_50 = arith.constant 1.000000e+00 : f32
    %99 = vector.broadcast %cst_50 : f32 to vector<8x128xf32>
    %100 = arith.addf %99, %98 : vector<8x128xf32>
    %101 = arith.divf %99, %100 : vector<8x128xf32>
    %102 = vector.extract_strided_slice %95 {offsets = [0, 128], sizes = [8, 128], strides = [1, 1]} : vector<8x512xf32> to vector<8x128xf32>
    %103 = arith.negf %102 : vector<8x128xf32>
    %104 = math.exp %103 : vector<8x128xf32>
    %cst_51 = arith.constant 1.000000e+00 : f32
    %105 = vector.broadcast %cst_51 : f32 to vector<8x128xf32>
    %106 = arith.addf %105, %104 : vector<8x128xf32>
    %107 = arith.divf %105, %106 : vector<8x128xf32>
    %108 = vector.extract_strided_slice %95 {offsets = [0, 256], sizes = [8, 128], strides = [1, 1]} : vector<8x512xf32> to vector<8x128xf32>
    %109 = math.tanh %108 : vector<8x128xf32>
    %110 = vector.extract_strided_slice %95 {offsets = [0, 384], sizes = [8, 128], strides = [1, 1]} : vector<8x512xf32> to vector<8x128xf32>
    %111 = arith.negf %110 : vector<8x128xf32>
    %112 = math.exp %111 : vector<8x128xf32>
    %cst_52 = arith.constant 1.000000e+00 : f32
    %113 = vector.broadcast %cst_52 : f32 to vector<8x128xf32>
    %114 = arith.addf %113, %112 : vector<8x128xf32>
    %115 = arith.divf %113, %114 : vector<8x128xf32>
    %116 = arith.mulf %107, %89 : vector<8x128xf32>
    %117 = arith.mulf %101, %109 : vector<8x128xf32>
    %118 = arith.addf %116, %117 : vector<8x128xf32>
    %119 = math.tanh %118 : vector<8x128xf32>
    %120 = arith.mulf %115, %119 : vector<8x128xf32>
    %c0_53 = arith.constant 0 : index
    %c0_54 = arith.constant 0 : index
    %121 = vector.load %arg7[%c0_53, %c0_54] : memref<8x128xf32, #tpu.memory_space<vmem>>, vector<8x128xf32>
    tpu.vector_store %arg7[%c0_53, %c0_54], %120 {strides = array<i32>} : memref<8x128xf32, #tpu.memory_space<vmem>>, vector<8x128xf32>,
    %c0_55 = arith.constant 0 : index
    %c0_56 = arith.constant 0 : index
    %122 = vector.load %arg8[%c0_55, %c0_56] : memref<8x128xf32, #tpu.memory_space<vmem>>, vector<8x128xf32>
    tpu.vector_store %arg8[%c0_55, %c0_56], %118 {strides = array<i32>} : memref<8x128xf32, #tpu.memory_space<vmem>>, vector<8x128xf32>,
    %123 = arith.index_cast %c2_i32 : i32 to index
    %c0_57 = arith.constant 0 : index
    %c0_58 = arith.constant 0 : index
    %124 = vector.load %arg4[%123, %c0_57, %c0_58] : memref<3x8x128xf32, #tpu.memory_space<vmem>>, vector<1x8x128xf32>
    %125 = vector.shape_cast %124 : vector<1x8x128xf32> to vector<8x128xf32>
    %126 = vector.shape_cast %120 : vector<8x128xf32> to vector<1x8x128xf32>
    tpu.vector_store %arg4[%123, %c0_57, %c0_58], %126 {strides = array<i32>} : memref<3x8x128xf32, #tpu.memory_space<vmem>>, vector<1x8x128xf32>,
    %c3_i32 = arith.constant 3 : i32
    %c0_i32_59 = arith.constant 0 : i32
    %127 = arith.cmpi eq, %arg0, %c0_i32_59 : i32
    %128 = arith.extui %127 : i1 to i32
    %c0_i32_60 = arith.constant 0 : i32
    %129 = arith.cmpi ne, %128, %c0_i32_60 : i32
    scf.if %129 {
      %c0_61 = arith.constant 0 : index
      %c0_62 = arith.constant 0 : index
      %130 = vector.load %arg8[%c0_61, %c0_62] : memref<8x128xf32, #tpu.memory_space<vmem>>, vector<8x128xf32>
      %c0_63 = arith.constant 0 : index
      %c0_64 = arith.constant 0 : index
      %131 = vector.load %arg5[%c0_63, %c0_64] : memref<8x128xf32, #tpu.memory_space<vmem>>, vector<8x128xf32>
      tpu.vector_store %arg5[%c0_63, %c0_64], %130 {strides = array<i32>} : memref<8x128xf32, #tpu.memory_space<vmem>>, vector<8x128xf32>,
    } else {
    }
    return
  }
  func.func @transform_0(%arg0: i32) -> (i32, i32, i32) {
    %c0_i32 = arith.constant 0 : i32
    %c0_i32_0 = arith.constant 0 : i32
    %c0_i32_1 = arith.constant 0 : i32
    return %arg0, %c0_i32, %c0_i32_0 : i32, i32, i32
  }
  func.func @transform_1(%arg0: i32) -> (i32, i32) {
    %c0_i32 = arith.constant 0 : i32
    %c0_i32_0 = arith.constant 0 : i32
    %c0_i32_1 = arith.constant 0 : i32
    return %c0_i32, %c0_i32_0 : i32, i32
  }
  func.func @transform_2(%arg0: i32) -> (i32, i32) {
    %c0_i32 = arith.constant 0 : i32
    %c0_i32_0 = arith.constant 0 : i32
    %c0_i32_1 = arith.constant 0 : i32
    return %c0_i32, %c0_i32_0 : i32, i32
  }
  func.func @transform_3(%arg0: i32) -> (i32, i32, i32) {
    %c0_i32 = arith.constant 0 : i32
    %c0_i32_0 = arith.constant 0 : i32
    %c0_i32_1 = arith.constant 0 : i32
    return %arg0, %c0_i32, %c0_i32_0 : i32, i32, i32
  }
  func.func @transform_4(%arg0: i32) -> (i32, i32) {
    %c0_i32 = arith.constant 0 : i32
    %c0_i32_0 = arith.constant 0 : i32
    %c0_i32_1 = arith.constant 0 : i32
    return %c0_i32, %c0_i32_0 : i32, i32
  }
}

</mosaic_0001>

<llo_original>
// kernel: lstm_forward.1
$region0: #{lstm_forward.1}
  #allocation0 [shape = 'u32[]', space=smem, size = 0x4, offset = 0x4, fixed_abs, tag = 'smem constant byte address 0x4 - core index']
  #allocation1 [shape = 'u32[144,128]{1,0:T(1,128)}', space=vmem, size = 0x12000, scoped, tag = 'internal scratch']
  #allocation2 [shape = 'f32[3,8,512]{2,1,0:T(8,128)}', space=vmem, size = 0xc000, scoped, tag = 'scratch operand']
  #allocation3 [shape = 'f32[8,128]{1,0:T(8,128)}', space=vmem, size = 0x1000, scoped, tag = 'scratch operand']
  #allocation4 [shape = 'f32[8,128]{1,0:T(8,128)}', space=vmem, size = 0x1000, scoped, tag = 'scratch operand']
  %s0 = inlined_call_operand.vmem [shape: bf16[3,8,3], index: 0, kind: input, shape index: {}]
  %s1 = inlined_call_operand.vmem [shape: bf16[3,512], index: 1, kind: input, shape index: {}]
  %s2 = inlined_call_operand.vmem [shape: bf16[128,512], index: 2, kind: input, shape index: {}]
  %s3 = inlined_call_operand.vmem [shape: f32[3,8,128], index: 3, kind: output, shape index: {0}]
  %s4 = inlined_call_operand.vmem [shape: f32[8,128], index: 4, kind: output, shape index: {1}]
  %5 = xla_tuple %s3, %s4
  %s6 = sld [smem:[#allocation0]]
  $region38: #{lstm_forward.1} parent=0
    _
  %s8 = ssub.s32 1, %s6
  %s9 = scalar_select 0, %s8, %s6
  // Predicated region
  $region2: #{lstm_forward.1} parent=0 // pred_check
    _
  $region3: #{lstm_forward.1} parent=0 // pred_check_branch
    %11 = sbr.rel (0) target = $region5
  $region4: #{lstm_forward.1} parent=0 // pred_region
    _
  $region5: #{lstm_forward.1} parent=0 // pred_fallthru
    _
  // Predicated region
  $region6: #{lstm_forward.1} parent=0 // pred_check
    _
  $region7: #{lstm_forward.1} parent=0 // pred_check_branch
    %13 = sbr.rel (0) target = $region9
  $region8: #{lstm_forward.1} parent=0 // pred_region
    _
  $region9: #{lstm_forward.1} parent=0 // pred_fallthru
    _
  // Predicated region
  $region10: #{lstm_forward.1} parent=0 // pred_check
    _
  $region11: #{lstm_forward.1} parent=0 // pred_check_branch
    %15 = sbr.rel (0) target = $region13
  $region12: #{lstm_forward.1} parent=0 // pred_region
    _
  $region13: #{lstm_forward.1} parent=0 // pred_fallthru
    _
  %p17 = scmp.eq.s32.totalorder 0, 0
  // Predicated region
  $region14: #{lstm_forward.1} parent=0 // pred_check
    %p18 = pneg %p17
  $region15: #{lstm_forward.1} parent=0 // pred_check_branch
    %20 = sbr.rel (%p18) target = $region17
  $region16: #{lstm_forward.1} parent=0 // pred_region
    %21 = vst [vmem:[#allocation3] sm:$0xff] 0.0
    %22 = vst [vmem:[#allocation4] sm:$0xff] 0.0
  $region17: #{lstm_forward.1} parent=0 // pred_fallthru
    _
  %v23 = vld [vmem:[%s0] sm:$0xf]
  %v24 = vld [vmem:[%s0 + $0x4] sm:$0xf]
  %v25 = vld [vmem:[%s0 + $0x8] sm:$0xf]
  %v26 = vld [vmem:[%s1] sm:$0xff]
  %v30 = vunpack.c.l.b16 %v23
  %v31 = vunpack.c.l.b16 %v24
  %v32 = vunpack.c.l.b16 %v25
  %v33 = vpack.c.b16 %v31, %v30
  %v34 = vpack.c.b16 %v32, %v32
  %v36 = vcombine.high %v26, %v26
  %v38 = vunpack.c.l.s4 1983009808
  %v39 = vunpack.c.0.s8 %v38
  %v40 = vlaneseq
  %v41 = vshrl.u32 %v40, 7
  %v42 = vsub.s32 %v39, %v41
  %v43 = vrot.slane %v26, %v42
  %v45 = vunpack.c.l.s4 1983009808
  %v46 = vunpack.c.0.s8 %v45
  %v47 = vlaneseq
  %v48 = vshrl.u32 %v47, 7
  %v49 = vsub.s32 %v46, %v48
  %v50 = vrot.slane %v36, %v49
  %v51 = vcombine.high %v43, %v43
  %v52 = vcombine.high %v50, %v50
  %vm53 = vcmask 23552
  %v55 = vsel %vm53, %v33, 0
  %v58 = vsel %vm53, %v34, 0
  %vm60 = vcmask 1040384
  %vm61 = vcmask 1041408
  %v62 = vsel %vm60, 4294967295, 65535
  %v63 = vsel %vm61, %v62, 0
  %v65 = vand.u32 %v43, %v63
  %v68 = vand.u32 %v51, %v63
  %v71 = vand.u32 %v50, %v63
  %v74 = vand.u32 %v52, %v63
  %76 = vmatprep.subr.bf16.mxu0 %v68
  %77 = vmatpush1.bf16.msra.mxu0 %v65
  %78 = vmatprep.subr.bf16.mxu0 0
  %79 = vmatpush1.bf16.msra.mxu0 0
  %80 = vmatprep.subr.bf16.mxu0 0
  %81 = vmatpush1.bf16.msra.mxu0 0
  %82 = vmatprep.subr.bf16.mxu0 0
  %83 = vmatpush1.bf16.msra.mxu0 0
  %84 = vmatprep.subr.bf16.mxu0 0
  %85 = vmatpush1.bf16.msra.mxu0 0
  %86 = vmatprep.subr.bf16.mxu0 0
  %87 = vmatpush1.bf16.msra.mxu0 0
  %88 = vmatprep.subr.bf16.mxu0 0
  %89 = vmatpush1.bf16.msra.mxu0 0
  %90 = vmatprep.subr.bf16.mxu0 0
  %91 = vmatpush1.bf16.msra.mxu0 0
  %92 = vmatprep.subr.bf16.mxu0 0
  %93 = vmatpush1.bf16.msra.mxu0 0
  %94 = vmatprep.subr.bf16.mxu0 0
  %95 = vmatpush1.bf16.msra.mxu0 0
  %96 = vmatprep.subr.bf16.mxu0 0
  %97 = vmatpush1.bf16.msra.mxu0 0
  %98 = vmatprep.subr.bf16.mxu0 0
  %99 = vmatpush1.bf16.msra.mxu0 0
  %100 = vmatprep.subr.bf16.mxu0 0
  %101 = vmatpush1.bf16.msra.mxu0 0
  %102 = vmatprep.subr.bf16.mxu0 0
  %103 = vmatpush1.bf16.msra.mxu0 0
  %104 = vmatprep.subr.bf16.mxu0 0
  %105 = vmatpush1.bf16.msra.mxu0 0
  %106 = vmatprep.subr.bf16.mxu0 0
  %107 = vmatpush1.bf16.msra.mxu0 0
  %108 = vmatprep.mubr.bf16.mxu0 0
  %109 = vmatmul.mubr.bf16.gmra.mrb[0].mxu0 %v55
  %v110 = vpop.f32.mrb[0].mxu0
  %v111 = vadd.f32 0.0, %v110
  %v112 = vpop.f32.mrb[0].mxu0
  %v113 = vadd.f32 0.0, %v112
  %v114 = vpop.f32.mrb[0].mxu0
  %v115 = vadd.f32 0.0, %v114
  %v116 = vpop.f32.mrb[0].mxu0
  %v117 = vadd.f32 0.0, %v116
  %118 = vmatprep.mubr.bf16.mxu0 0
  %119 = vmatmul.mubr.bf16.gmra.mrb[0].mxu0 %v58
  %v120 = vpop.f32.mrb[0].mxu0
  %v121 = vadd.f32 0.0, %v120
  %v122 = vpop.f32.mrb[0].mxu0
  %v123 = vadd.f32 0.0, %v122
  %v124 = vpop.f32.mrb[0].mxu0
  %v125 = vpop.f32.mrb[0].mxu0
  %126 = vdwg.mxu0
  %127 = vmatprep.subr.bf16.mxu0 %v74
  %128 = vmatpush1.bf16.msra.mxu0 %v71
  %129 = vmatprep.subr.bf16.mxu0 0
  %130 = vmatpush1.bf16.msra.mxu0 0
  %131 = vmatprep.subr.bf16.mxu0 0
  %132 = vmatpush1.bf16.msra.mxu0 0
  %133 = vmatprep.subr.bf16.mxu0 0
  %134 = vmatpush1.bf16.msra.mxu0 0
  %135 = vmatprep.subr.bf16.mxu0 0
  %136 = vmatpush1.bf16.msra.mxu0 0
  %137 = vmatprep.subr.bf16.mxu0 0
  %138 = vmatpush1.bf16.msra.mxu0 0
  %139 = vmatprep.subr.bf16.mxu0 0
  %140 = vmatpush1.bf16.msra.mxu0 0
  %141 = vmatprep.subr.bf16.mxu0 0
  %142 = vmatpush1.bf16.msra.mxu0 0
  %143 = vmatprep.subr.bf16.mxu0 0
  %144 = vmatpush1.bf16.msra.mxu0 0
  %145 = vmatprep.subr.bf16.mxu0 0
  %146 = vmatpush1.bf16.msra.mxu0 0
  %147 = vmatprep.subr.bf16.mxu0 0
  %148 = vmatpush1.bf16.msra.mxu0 0
  %149 = vmatprep.subr.bf16.mxu0 0
  %150 = vmatpush1.bf16.msra.mxu0 0
  %151 = vmatprep.subr.bf16.mxu0 0
  %152 = vmatpush1.bf16.msra.mxu0 0
  %153 = vmatprep.subr.bf16.mxu0 0
  %154 = vmatpush1.bf16.msra.mxu0 0
  %155 = vmatprep.subr.bf16.mxu0 0
  %156 = vmatpush1.bf16.msra.mxu0 0
  %157 = vmatprep.subr.bf16.mxu0 0
  %158 = vmatpush1.bf16.msra.mxu0 0
  %159 = vmatprep.mubr.bf16.mxu0 0
  %160 = vmatmul.mubr.bf16.gmra.mrb[0].mxu0 %v55
  %v161 = vpop.f32.mrb[0].mxu0
  %v162 = vadd.f32 0.0, %v161
  %v163 = vpop.f32.mrb[0].mxu0
  %v164 = vadd.f32 0.0, %v163
  %v165 = vpop.f32.mrb[0].mxu0
  %v166 = vadd.f32 0.0, %v165
  %v167 = vpop.f32.mrb[0].mxu0
  %v168 = vadd.f32 0.0, %v167
  %169 = vmatprep.mubr.bf16.mxu0 0
  %170 = vmatmul.mubr.bf16.gmra.mrb[0].mxu0 %v58
  %v171 = vpop.f32.mrb[0].mxu0
  %v172 = vadd.f32 0.0, %v171
  %v173 = vpop.f32.mrb[0].mxu0
  %v174 = vadd.f32 0.0, %v173
  %v175 = vpop.f32.mrb[0].mxu0
  %v176 = vpop.f32.mrb[0].mxu0
  %177 = vdwg.mxu0
  %178 = vst [vmem:[#allocation2] sm:$0xff] %v111
  %179 = vst [vmem:[#allocation2 + $0x8] sm:$0xff] %v113
  %180 = vst [vmem:[#allocation2 + $0x10] sm:$0xff] %v162
  %181 = vst [vmem:[#allocation2 + $0x18] sm:$0xff] %v164
  %182 = vst [vmem:[#allocation2 + $0x20] sm:$0xff] %v115
  %183 = vst [vmem:[#allocation2 + $0x28] sm:$0xff] %v117
  %184 = vst [vmem:[#allocation2 + $0x30] sm:$0xff] %v166
  %185 = vst [vmem:[#allocation2 + $0x38] sm:$0xff] %v168
  %186 = vst [vmem:[#allocation2 + $0x40] sm:$0xff] %v121
  %187 = vst [vmem:[#allocation2 + $0x48] sm:$0xff] %v123
  %188 = vst [vmem:[#allocation2 + $0x50] sm:$0xff] %v172
  %189 = vst [vmem:[#allocation2 + $0x58] sm:$0xff] %v174
  %v190 = vld [vmem:[%s2] sm:$0xff]
  %v191 = vld [vmem:[%s2 + $0x8] sm:$0xff]
  %v192 = vld [vmem:[%s2 + $0x10] sm:$0xff]
  %v193 = vld [vmem:[%s2 + $0x18] sm:$0xff]
  %v194 = vld [vmem:[%s2 + $0x20] sm:$0xff]
  %v195 = vld [vmem:[%s2 + $0x28] sm:$0xff]
  %v196 = vld [vmem:[%s2 + $0x30] sm:$0xff]
  %v197 = vld [vmem:[%s2 + $0x38] sm:$0xff]
  %v198 = vld [vmem:[%s2 + $0x40] sm:$0xff]
  %v199 = vld [vmem:[%s2 + $0x48] sm:$0xff]
  %v200 = vld [vmem:[%s2 + $0x50] sm:$0xff]
  %v201 = vld [vmem:[%s2 + $0x58] sm:$0xff]
  %v202 = vld [vmem:[%s2 + $0x60] sm:$0xff]
  %v203 = vld [vmem:[%s2 + $0x68] sm:$0xff]
  %v204 = vld [vmem:[%s2 + $0x70] sm:$0xff]
  %v205 = vld [vmem:[%s2 + $0x78] sm:$0xff]
  %v206 = vld [vmem:[%s2 + $0x80] sm:$0xff]
  %v207 = vld [vmem:[%s2 + $0x88] sm:$0xff]
  %v208 = vld [vmem:[%s2 + $0x90] sm:$0xff]
  %v209 = vld [vmem:[%s2 + $0x98] sm:$0xff]
  %v210 = vld [vmem:[%s2 + $0xa0] sm:$0xff]
  %v211 = vld [vmem:[%s2 + $0xa8] sm:$0xff]
  %v212 = vld [vmem:[%s2 + $0xb0] sm:$0xff]
  %v213 = vld [vmem:[%s2 + $0xb8] sm:$0xff]
  %v214 = vld [vmem:[%s2 + $0xc0] sm:$0xff]
  %v215 = vld [vmem:[%s2 + $0xc8] sm:$0xff]
  %v216 = vld [vmem:[%s2 + $0xd0] sm:$0xff]
  %v217 = vld [vmem:[%s2 + $0xd8] sm:$0xff]
  %v218 = vld [vmem:[%s2 + $0xe0] sm:$0xff]
  %v219 = vld [vmem:[%s2 + $0xe8] sm:$0xff]
  %v220 = vld [vmem:[%s2 + $0xf0] sm:$0xff]
  %v221 = vld [vmem:[%s2 + $0xf8] sm:$0xff]
  %v222 = vld [vmem:[#allocation3] sm:$0xff]
  %v223 = vld [vmem:[#allocation4] sm:$0xff]
  %v224 = vld [vmem:[#allocation2] sm:$0xff]
  %v225 = vld [vmem:[#allocation2 + $0x8] sm:$0xff]
  %v226 = vld [vmem:[#allocation2 + $0x10] sm:$0xff]
  %v227 = vld [vmem:[#allocation2 + $0x18] sm:$0xff]
  %v228 = vpack.c.bf16 %v222, %v222
  %v261 = vunpack.c.l.b16 %v190
  %v262 = vunpack.c.h.b16 %v190
  %v263 = vunpack.c.l.b16 %v191
  %v264 = vunpack.c.h.b16 %v191
  %v265 = vunpack.c.l.b16 %v192
  %v266 = vunpack.c.h.b16 %v192
  %v267 = vunpack.c.l.b16 %v193
  %v268 = vunpack.c.h.b16 %v193
  %v269 = vunpack.c.l.b16 %v194
  %v270 = vunpack.c.h.b16 %v194
  %v271 = vunpack.c.l.b16 %v195
  %v272 = vunpack.c.h.b16 %v195
  %v273 = vunpack.c.l.b16 %v196
  %v274 = vunpack.c.h.b16 %v196
  %v275 = vunpack.c.l.b16 %v197
  %v276 = vunpack.c.h.b16 %v197
  %v277 = vunpack.c.l.b16 %v198
  %v278 = vunpack.c.h.b16 %v198
  %v279 = vunpack.c.l.b16 %v199
  %v280 = vunpack.c.h.b16 %v199
  %v281 = vunpack.c.l.b16 %v200
  %v282 = vunpack.c.h.b16 %v200
  %v283 = vunpack.c.l.b16 %v201
  %v284 = vunpack.c.h.b16 %v201
  %v285 = vunpack.c.l.b16 %v202
  %v286 = vunpack.c.h.b16 %v202
  %v287 = vunpack.c.l.b16 %v203
  %v288 = vunpack.c.h.b16 %v203
  %v289 = vunpack.c.l.b16 %v204
  %v290 = vunpack.c.h.b16 %v204
  %v291 = vunpack.c.l.b16 %v205
  %v292 = vunpack.c.h.b16 %v205
  %v293 = vunpack.c.l.b16 %v206
  %v294 = vunpack.c.h.b16 %v206
  %v295 = vunpack.c.l.b16 %v207
  %v296 = vunpack.c.h.b16 %v207
  %v297 = vunpack.c.l.b16 %v208
  %v298 = vunpack.c.h.b16 %v208
  %v299 = vunpack.c.l.b16 %v209
  %v300 = vunpack.c.h.b16 %v209
  %v301 = vunpack.c.l.b16 %v210
  %v302 = vunpack.c.h.b16 %v210
  %v303 = vunpack.c.l.b16 %v211
  %v304 = vunpack.c.h.b16 %v211
  %v305 = vunpack.c.l.b16 %v212
  %v306 = vunpack.c.h.b16 %v212
  %v307 = vunpack.c.l.b16 %v213
  %v308 = vunpack.c.h.b16 %v213
  %v309 = vunpack.c.l.b16 %v214
  %v310 = vunpack.c.h.b16 %v214
  %v311 = vunpack.c.l.b16 %v215
  %v312 = vunpack.c.h.b16 %v215
  %v313 = vunpack.c.l.b16 %v216
  %v314 = vunpack.c.h.b16 %v216
  %v315 = vunpack.c.l.b16 %v217
  %v316 = vunpack.c.h.b16 %v217
  %v317 = vunpack.c.l.b16 %v218
  %v318 = vunpack.c.h.b16 %v218
  %v319 = vunpack.c.l.b16 %v219
  %v320 = vunpack.c.h.b16 %v219
  %v321 = vunpack.c.l.b16 %v220
  %v322 = vunpack.c.h.b16 %v220
  %v323 = vunpack.c.l.b16 %v221
  %v324 = vunpack.c.h.b16 %v221
  %v325 = vpack.c.b16 %v265, %v261
  %v326 = vpack.c.b16 %v266, %v262
  %v327 = vpack.c.b16 %v267, %v263
  %v328 = vpack.c.b16 %v268, %v264
  %v329 = vpack.c.b16 %v273, %v269
  %v330 = vpack.c.b16 %v274, %v270
  %v331 = vpack.c.b16 %v275, %v271
  %v332 = vpack.c.b16 %v276, %v272
  %v333 = vpack.c.b16 %v281, %v277
  %v334 = vpack.c.b16 %v282, %v278
  %v335 = vpack.c.b16 %v283, %v279
  %v336 = vpack.c.b16 %v284, %v280
  %v337 = vpack.c.b16 %v289, %v285
  %v338 = vpack.c.b16 %v290, %v286
  %v339 = vpack.c.b16 %v291, %v287
  %v340 = vpack.c.b16 %v292, %v288
  %v341 = vpack.c.b16 %v297, %v293
  %v342 = vpack.c.b16 %v298, %v294
  %v343 = vpack.c.b16 %v299, %v295
  %v344 = vpack.c.b16 %v300, %v296
  %v345 = vpack.c.b16 %v305, %v301
  %v346 = vpack.c.b16 %v306, %v302
  %v347 = vpack.c.b16 %v307, %v303
  %v348 = vpack.c.b16 %v308, %v304
  %v349 = vpack.c.b16 %v313, %v309
  %v350 = vpack.c.b16 %v314, %v310
  %v351 = vpack.c.b16 %v315, %v311
  %v352 = vpack.c.b16 %v316, %v312
  %v353 = vpack.c.b16 %v321, %v317
  %v354 = vpack.c.b16 %v322, %v318
  %v355 = vpack.c.b16 %v323, %v319
  %v356 = vpack.c.b16 %v324, %v320
  %389 = vmatprep.subr.bf16.mxu0 %v326
  %390 = vmatpush1.bf16.msra.mxu0 %v325
  %391 = vmatprep.subr.bf16.mxu0 %v330
  %392 = vmatpush1.bf16.msra.mxu0 %v329
  %393 = vmatprep.subr.bf16.mxu0 %v334
  %394 = vmatpush1.bf16.msra.mxu0 %v333
  %395 = vmatprep.subr.bf16.mxu0 %v338
  %396 = vmatpush1.bf16.msra.mxu0 %v337
  %397 = vmatprep.subr.bf16.mxu0 %v342
  %398 = vmatpush1.bf16.msra.mxu0 %v341
  %399 = vmatprep.subr.bf16.mxu0 %v346
  %400 = vmatpush1.bf16.msra.mxu0 %v345
  %401 = vmatprep.subr.bf16.mxu0 %v350
  %402 = vmatpush1.bf16.msra.mxu0 %v349
  %403 = vmatprep.subr.bf16.mxu0 %v354
  %404 = vmatpush1.bf16.msra.mxu0 %v353
  %405 = vmatprep.subr.bf16.mxu0 0
  %406 = vmatpush1.bf16.msra.mxu0 0
  %407 = vmatprep.subr.bf16.mxu0 0
  %408 = vmatpush1.bf16.msra.mxu0 0
  %409 = vmatprep.subr.bf16.mxu0 0
  %410 = vmatpush1.bf16.msra.mxu0 0
  %411 = vmatprep.subr.bf16.mxu0 0
  %412 = vmatpush1.bf16.msra.mxu0 0
  %413 = vmatprep.subr.bf16.mxu0 0
  %414 = vmatpush1.bf16.msra.mxu0 0
  %415 = vmatprep.subr.bf16.mxu0 0
  %416 = vmatpush1.bf16.msra.mxu0 0
  %417 = vmatprep.subr.bf16.mxu0 0
  %418 = vmatpush1.bf16.msra.mxu0 0
  %419 = vmatprep.subr.bf16.mxu0 0
  %420 = vmatpush1.bf16.msra.mxu0 0
  %421 = vmatprep.mubr.bf16.mxu0 0
  %422 = vmatmul.mubr.bf16.gmra.mrb[0].mxu0 %v228
  %v423 = vpop.f32.mrb[0].mxu0
  %v424 = vadd.f32 0.0, %v423
  %v425 = vpop.f32.mrb[0].mxu0
  %v426 = vadd.f32 0.0, %v425
  %v427 = vpop.f32.mrb[0].mxu0
  %v428 = vpop.f32.mrb[0].mxu0
  %429 = vdwg.mxu0
  %430 = vmatprep.subr.bf16.mxu0 %v328
  %431 = vmatpush1.bf16.msra.mxu0 %v327
  %432 = vmatprep.subr.bf16.mxu0 %v332
  %433 = vmatpush1.bf16.msra.mxu0 %v331
  %434 = vmatprep.subr.bf16.mxu0 %v336
  %435 = vmatpush1.bf16.msra.mxu0 %v335
  %436 = vmatprep.subr.bf16.mxu0 %v340
  %437 = vmatpush1.bf16.msra.mxu0 %v339
  %438 = vmatprep.subr.bf16.mxu0 %v344
  %439 = vmatpush1.bf16.msra.mxu0 %v343
  %440 = vmatprep.subr.bf16.mxu0 %v348
  %441 = vmatpush1.bf16.msra.mxu0 %v347
  %442 = vmatprep.subr.bf16.mxu0 %v352
  %443 = vmatpush1.bf16.msra.mxu0 %v351
  %444 = vmatprep.subr.bf16.mxu0 %v356
  %445 = vmatpush1.bf16.msra.mxu0 %v355
  %446 = vmatprep.subr.bf16.mxu0 0
  %447 = vmatpush1.bf16.msra.mxu0 0
  %448 = vmatprep.subr.bf16.mxu0 0
  %449 = vmatpush1.bf16.msra.mxu0 0
  %450 = vmatprep.subr.bf16.mxu0 0
  %451 = vmatpush1.bf16.msra.mxu0 0
  %452 = vmatprep.subr.bf16.mxu0 0
  %453 = vmatpush1.bf16.msra.mxu0 0
  %454 = vmatprep.subr.bf16.mxu0 0
  %455 = vmatpush1.bf16.msra.mxu0 0
  %456 = vmatprep.subr.bf16.mxu0 0
  %457 = vmatpush1.bf16.msra.mxu0 0
  %458 = vmatprep.subr.bf16.mxu0 0
  %459 = vmatpush1.bf16.msra.mxu0 0
  %460 = vmatprep.subr.bf16.mxu0 0
  %461 = vmatpush1.bf16.msra.mxu0 0
  %462 = vmatprep.mubr.bf16.mxu0 0
  %463 = vmatmul.mubr.bf16.gmra.mrb[0].mxu0 %v228
  %v464 = vpop.f32.mrb[0].mxu0
  %v465 = vadd.f32 0.0, %v464
  %v466 = vpop.f32.mrb[0].mxu0
  %v467 = vadd.f32 0.0, %v466
  %v468 = vpop.f32.mrb[0].mxu0
  %v469 = vpop.f32.mrb[0].mxu0
  %470 = vdwg.mxu0
  %v471 = vadd.f32 %v224, %v424
  %v472 = vadd.f32 %v225, %v426
  %v473 = vadd.f32 %v226, %v465
  %v474 = vadd.f32 %v227, %v467
  %v475 = vxor.u32 %v471, 2147483648
  %v476 = vmul.f32 %v475, 1.442695
  %v477 = vpow.pop %v476
  %v478 = vadd.f32 %v477, 1.0
  %v479 = vrcp.pop %v478
  %v480 = vmul.f32 1.0, %v479
  %v481 = vxor.u32 %v472, 2147483648
  %v482 = vmul.f32 %v481, 1.442695
  %v483 = vpow.pop %v482
  %v484 = vadd.f32 %v483, 1.0
  %v485 = vrcp.pop %v484
  %v486 = vmul.f32 1.0, %v485
  %v487 = vtanh.pop %v473
  %v488 = vxor.u32 %v474, 2147483648
  %v489 = vmul.f32 %v488, 1.442695
  %v490 = vpow.pop %v489
  %v491 = vadd.f32 %v490, 1.0
  %v492 = vrcp.pop %v491
  %v493 = vmul.f32 1.0, %v492
  %v494 = vmul.f32 %v486, %v223
  %v495 = vmul.f32 %v480, %v487
  %v496 = vadd.f32 %v494, %v495
  %v497 = vtanh.pop %v496
  %v498 = vmul.f32 %v493, %v497
  %499 = vst [vmem:[#allocation3] sm:$0xff] %v498
  %500 = vst [vmem:[#allocation4] sm:$0xff] %v496
  %501 = vst [vmem:[%s3] sm:$0xff] %v498
  %v502 = vld [vmem:[#allocation3] sm:$0xff]
  %v503 = vld [vmem:[#allocation4] sm:$0xff]
  %s504 = scalar_lea.vmem [#allocation2], 32
  %v505 = vld [vmem:[%s504] sm:$0xff]
  %v506 = vld [vmem:[%s504 + $0x8] sm:$0xff]
  %v507 = vld [vmem:[%s504 + $0x10] sm:$0xff]
  %v508 = vld [vmem:[%s504 + $0x18] sm:$0xff]
  %v509 = vpack.c.bf16 %v502, %v502
  %510 = vmatprep.subr.bf16.mxu0 %v326
  %511 = vmatpush1.bf16.msra.mxu0 %v325
  %512 = vmatprep.subr.bf16.mxu0 %v330
  %513 = vmatpush1.bf16.msra.mxu0 %v329
  %514 = vmatprep.subr.bf16.mxu0 %v334
  %515 = vmatpush1.bf16.msra.mxu0 %v333
  %516 = vmatprep.subr.bf16.mxu0 %v338
  %517 = vmatpush1.bf16.msra.mxu0 %v337
  %518 = vmatprep.subr.bf16.mxu0 %v342
  %519 = vmatpush1.bf16.msra.mxu0 %v341
  %520 = vmatprep.subr.bf16.mxu0 %v346
  %521 = vmatpush1.bf16.msra.mxu0 %v345
  %522 = vmatprep.subr.bf16.mxu0 %v350
  %523 = vmatpush1.bf16.msra.mxu0 %v349
  %524 = vmatprep.subr.bf16.mxu0 %v354
  %525 = vmatpush1.bf16.msra.mxu0 %v353
  %526 = vmatprep.subr.bf16.mxu0 0
  %527 = vmatpush1.bf16.msra.mxu0 0
  %528 = vmatprep.subr.bf16.mxu0 0
  %529 = vmatpush1.bf16.msra.mxu0 0
  %530 = vmatprep.subr.bf16.mxu0 0
  %531 = vmatpush1.bf16.msra.mxu0 0
  %532 = vmatprep.subr.bf16.mxu0 0
  %533 = vmatpush1.bf16.msra.mxu0 0
  %534 = vmatprep.subr.bf16.mxu0 0
  %535 = vmatpush1.bf16.msra.mxu0 0
  %536 = vmatprep.subr.bf16.mxu0 0
  %537 = vmatpush1.bf16.msra.mxu0 0
  %538 = vmatprep.subr.bf16.mxu0 0
  %539 = vmatpush1.bf16.msra.mxu0 0
  %540 = vmatprep.subr.bf16.mxu0 0
  %541 = vmatpush1.bf16.msra.mxu0 0
  %542 = vmatprep.mubr.bf16.mxu0 0
  %543 = vmatmul.mubr.bf16.gmra.mrb[0].mxu0 %v509
  %v544 = vpop.f32.mrb[0].mxu0
  %v545 = vadd.f32 0.0, %v544
  %v546 = vpop.f32.mrb[0].mxu0
  %v547 = vadd.f32 0.0, %v546
  %v548 = vpop.f32.mrb[0].mxu0
  %v549 = vpop.f32.mrb[0].mxu0
  %550 = vdwg.mxu0
  %551 = vmatprep.subr.bf16.mxu0 %v328
  %552 = vmatpush1.bf16.msra.mxu0 %v327
  %553 = vmatprep.subr.bf16.mxu0 %v332
  %554 = vmatpush1.bf16.msra.mxu0 %v331
  %555 = vmatprep.subr.bf16.mxu0 %v336
  %556 = vmatpush1.bf16.msra.mxu0 %v335
  %557 = vmatprep.subr.bf16.mxu0 %v340
  %558 = vmatpush1.bf16.msra.mxu0 %v339
  %559 = vmatprep.subr.bf16.mxu0 %v344
  %560 = vmatpush1.bf16.msra.mxu0 %v343
  %561 = vmatprep.subr.bf16.mxu0 %v348
  %562 = vmatpush1.bf16.msra.mxu0 %v347
  %563 = vmatprep.subr.bf16.mxu0 %v352
  %564 = vmatpush1.bf16.msra.mxu0 %v351
  %565 = vmatprep.subr.bf16.mxu0 %v356
  %566 = vmatpush1.bf16.msra.mxu0 %v355
  %567 = vmatprep.subr.bf16.mxu0 0
  %568 = vmatpush1.bf16.msra.mxu0 0
  %569 = vmatprep.subr.bf16.mxu0 0
  %570 = vmatpush1.bf16.msra.mxu0 0
  %571 = vmatprep.subr.bf16.mxu0 0
  %572 = vmatpush1.bf16.msra.mxu0 0
  %573 = vmatprep.subr.bf16.mxu0 0
  %574 = vmatpush1.bf16.msra.mxu0 0
  %575 = vmatprep.subr.bf16.mxu0 0
  %576 = vmatpush1.bf16.msra.mxu0 0
  %577 = vmatprep.subr.bf16.mxu0 0
  %578 = vmatpush1.bf16.msra.mxu0 0
  %579 = vmatprep.subr.bf16.mxu0 0
  %580 = vmatpush1.bf16.msra.mxu0 0
  %581 = vmatprep.subr.bf16.mxu0 0
  %582 = vmatpush1.bf16.msra.mxu0 0
  %583 = vmatprep.mubr.bf16.mxu0 0
  %584 = vmatmul.mubr.bf16.gmra.mrb[0].mxu0 %v509
  %v585 = vpop.f32.mrb[0].mxu0
  %v586 = vadd.f32 0.0, %v585
  %v587 = vpop.f32.mrb[0].mxu0
  %v588 = vadd.f32 0.0, %v587
  %v589 = vpop.f32.mrb[0].mxu0
  %v590 = vpop.f32.mrb[0].mxu0
  %591 = vdwg.mxu0
  %v592 = vadd.f32 %v505, %v545
  %v593 = vadd.f32 %v506, %v547
  %v594 = vadd.f32 %v507, %v586
  %v595 = vadd.f32 %v508, %v588
  %v596 = vxor.u32 %v592, 2147483648
  %v597 = vmul.f32 %v596, 1.442695
  %v598 = vpow.pop %v597
  %v599 = vadd.f32 %v598, 1.0
  %v600 = vrcp.pop %v599
  %v601 = vmul.f32 1.0, %v600
  %v602 = vxor.u32 %v593, 2147483648
  %v603 = vmul.f32 %v602, 1.442695
  %v604 = vpow.pop %v603
  %v605 = vadd.f32 %v604, 1.0
  %v606 = vrcp.pop %v605
  %v607 = vmul.f32 1.0, %v606
  %v608 = vtanh.pop %v594
  %v609 = vxor.u32 %v595, 2147483648
  %v610 = vmul.f32 %v609, 1.442695
  %v611 = vpow.pop %v610
  %v612 = vadd.f32 %v611, 1.0
  %v613 = vrcp.pop %v612
  %v614 = vmul.f32 1.0, %v613
  %v615 = vmul.f32 %v607, %v503
  %v616 = vmul.f32 %v601, %v608
  %v617 = vadd.f32 %v615, %v616
  %v618 = vtanh.pop %v617
  %v619 = vmul.f32 %v614, %v618
  %620 = vst [vmem:[#allocation3] sm:$0xff] %v619
  %621 = vst [vmem:[#allocation4] sm:$0xff] %v617
  %s622 = scalar_lea.vmem %s3, 8
  %623 = vst [vmem:[%s622] sm:$0xff] %v619
  %v624 = vld [vmem:[#allocation3] sm:$0xff]
  %v625 = vld [vmem:[#allocation4] sm:$0xff]
  %s626 = scalar_lea.vmem [#allocation2], 64
  %v627 = vld [vmem:[%s626] sm:$0xff]
  %v628 = vld [vmem:[%s626 + $0x8] sm:$0xff]
  %v629 = vld [vmem:[%s626 + $0x10] sm:$0xff]
  %v630 = vld [vmem:[%s626 + $0x18] sm:$0xff]
  %v631 = vpack.c.bf16 %v624, %v624
  %632 = vmatprep.subr.bf16.mxu0 %v326
  %633 = vmatpush1.bf16.msra.mxu0 %v325
  %634 = vmatprep.subr.bf16.mxu0 %v330
  %635 = vmatpush1.bf16.msra.mxu0 %v329
  %636 = vmatprep.subr.bf16.mxu0 %v334
  %637 = vmatpush1.bf16.msra.mxu0 %v333
  %638 = vmatprep.subr.bf16.mxu0 %v338
  %639 = vmatpush1.bf16.msra.mxu0 %v337
  %640 = vmatprep.subr.bf16.mxu0 %v342
  %641 = vmatpush1.bf16.msra.mxu0 %v341
  %642 = vmatprep.subr.bf16.mxu0 %v346
  %643 = vmatpush1.bf16.msra.mxu0 %v345
  %644 = vmatprep.subr.bf16.mxu0 %v350
  %645 = vmatpush1.bf16.msra.mxu0 %v349
  %646 = vmatprep.subr.bf16.mxu0 %v354
  %647 = vmatpush1.bf16.msra.mxu0 %v353
  %648 = vmatprep.subr.bf16.mxu0 0
  %649 = vmatpush1.bf16.msra.mxu0 0
  %650 = vmatprep.subr.bf16.mxu0 0
  %651 = vmatpush1.bf16.msra.mxu0 0
  %652 = vmatprep.subr.bf16.mxu0 0
  %653 = vmatpush1.bf16.msra.mxu0 0
  %654 = vmatprep.subr.bf16.mxu0 0
  %655 = vmatpush1.bf16.msra.mxu0 0
  %656 = vmatprep.subr.bf16.mxu0 0
  %657 = vmatpush1.bf16.msra.mxu0 0
  %658 = vmatprep.subr.bf16.mxu0 0
  %659 = vmatpush1.bf16.msra.mxu0 0
  %660 = vmatprep.subr.bf16.mxu0 0
  %661 = vmatpush1.bf16.msra.mxu0 0
  %662 = vmatprep.subr.bf16.mxu0 0
  %663 = vmatpush1.bf16.msra.mxu0 0
  %664 = vmatprep.mubr.bf16.mxu0 0
  %665 = vmatmul.mubr.bf16.gmra.mrb[0].mxu0 %v631
  %v666 = vpop.f32.mrb[0].mxu0
  %v667 = vadd.f32 0.0, %v666
  %v668 = vpop.f32.mrb[0].mxu0
  %v669 = vadd.f32 0.0, %v668
  %v670 = vpop.f32.mrb[0].mxu0
  %v671 = vpop.f32.mrb[0].mxu0
  %672 = vdwg.mxu0
  %673 = vmatprep.subr.bf16.mxu0 %v328
  %674 = vmatpush1.bf16.msra.mxu0 %v327
  %675 = vmatprep.subr.bf16.mxu0 %v332
  %676 = vmatpush1.bf16.msra.mxu0 %v331
  %677 = vmatprep.subr.bf16.mxu0 %v336
  %678 = vmatpush1.bf16.msra.mxu0 %v335
  %679 = vmatprep.subr.bf16.mxu0 %v340
  %680 = vmatpush1.bf16.msra.mxu0 %v339
  %681 = vmatprep.subr.bf16.mxu0 %v344
  %682 = vmatpush1.bf16.msra.mxu0 %v343
  %683 = vmatprep.subr.bf16.mxu0 %v348
  %684 = vmatpush1.bf16.msra.mxu0 %v347
  %685 = vmatprep.subr.bf16.mxu0 %v352
  %686 = vmatpush1.bf16.msra.mxu0 %v351
  %687 = vmatprep.subr.bf16.mxu0 %v356
  %688 = vmatpush1.bf16.msra.mxu0 %v355
  %689 = vmatprep.subr.bf16.mxu0 0
  %690 = vmatpush1.bf16.msra.mxu0 0
  %691 = vmatprep.subr.bf16.mxu0 0
  %692 = vmatpush1.bf16.msra.mxu0 0
  %693 = vmatprep.subr.bf16.mxu0 0
  %694 = vmatpush1.bf16.msra.mxu0 0
  %695 = vmatprep.subr.bf16.mxu0 0
  %696 = vmatpush1.bf16.msra.mxu0 0
  %697 = vmatprep.subr.bf16.mxu0 0
  %698 = vmatpush1.bf16.msra.mxu0 0
  %699 = vmatprep.subr.bf16.mxu0 0
  %700 = vmatpush1.bf16.msra.mxu0 0
  %701 = vmatprep.subr.bf16.mxu0 0
  %702 = vmatpush1.bf16.msra.mxu0 0
  %703 = vmatprep.subr.bf16.mxu0 0
  %704 = vmatpush1.bf16.msra.mxu0 0
  %705 = vmatprep.mubr.bf16.mxu0 0
  %706 = vmatmul.mubr.bf16.gmra.mrb[0].mxu0 %v631
  %v707 = vpop.f32.mrb[0].mxu0
  %v708 = vadd.f32 0.0, %v707
  %v709 = vpop.f32.mrb[0].mxu0
  %v710 = vadd.f32 0.0, %v709
  %v711 = vpop.f32.mrb[0].mxu0
  %v712 = vpop.f32.mrb[0].mxu0
  %713 = vdwg.mxu0
  %v714 = vadd.f32 %v627, %v667
  %v715 = vadd.f32 %v628, %v669
  %v716 = vadd.f32 %v629, %v708
  %v717 = vadd.f32 %v630, %v710
  %v718 = vxor.u32 %v714, 2147483648
  %v719 = vmul.f32 %v718, 1.442695
  %v720 = vpow.pop %v719
  %v721 = vadd.f32 %v720, 1.0
  %v722 = vrcp.pop %v721
  %v723 = vmul.f32 1.0, %v722
  %v724 = vxor.u32 %v715, 2147483648
  %v725 = vmul.f32 %v724, 1.442695
  %v726 = vpow.pop %v725
  %v727 = vadd.f32 %v726, 1.0
  %v728 = vrcp.pop %v727
  %v729 = vmul.f32 1.0, %v728
  %v730 = vtanh.pop %v716
  %v731 = vxor.u32 %v717, 2147483648
  %v732 = vmul.f32 %v731, 1.442695
  %v733 = vpow.pop %v732
  %v734 = vadd.f32 %v733, 1.0
  %v735 = vrcp.pop %v734
  %v736 = vmul.f32 1.0, %v735
  %v737 = vmul.f32 %v729, %v625
  %v738 = vmul.f32 %v723, %v730
  %v739 = vadd.f32 %v737, %v738
  %v740 = vtanh.pop %v739
  %v741 = vmul.f32 %v736, %v740
  %742 = vst [vmem:[#allocation3] sm:$0xff] %v741
  %743 = vst [vmem:[#allocation4] sm:$0xff] %v739
  %s744 = scalar_lea.vmem %s3, 16
  %745 = vst [vmem:[%s744] sm:$0xff] %v741
  // Predicated region
  $region18: #{lstm_forward.1} parent=0 // pred_check
    %p746 = pneg %p17
  $region19: #{lstm_forward.1} parent=0 // pred_check_branch
    %748 = sbr.rel (%p746) target = $region21
  $region20: #{lstm_forward.1} parent=0 // pred_region
    %v749 = vld [vmem:[#allocation4] sm:$0xff]
    %750 = vst [vmem:[%s4] sm:$0xff] %v749
  $region21: #{lstm_forward.1} parent=0 // pred_fallthru
    _
  // Predicated region
  $region22: #{lstm_forward.1} parent=0 // pred_check
    _
  $region23: #{lstm_forward.1} parent=0 // pred_check_branch
    %752 = sbr.rel (0) target = $region25
  $region24: #{lstm_forward.1} parent=0 // pred_region
    _
  $region25: #{lstm_forward.1} parent=0 // pred_fallthru
    _
  // Predicated region
  $region26: #{lstm_forward.1} parent=0 // pred_check
    _
  $region27: #{lstm_forward.1} parent=0 // pred_check_branch
    %754 = sbr.rel (0) target = $region29
  $region28: #{lstm_forward.1} parent=0 // pred_region
    _
  $region29: #{lstm_forward.1} parent=0 // pred_fallthru
    _
  // Predicated region
  $region30: #{lstm_forward.1} parent=0 // pred_check
    _
  $region31: #{lstm_forward.1} parent=0 // pred_check_branch
    %756 = sbr.rel (0) target = $region33
  $region32: #{lstm_forward.1} parent=0 // pred_region
    _
  $region33: #{lstm_forward.1} parent=0 // pred_fallthru
    _
  // Predicated region
  $region34: #{lstm_forward.1} parent=0 // pred_check
    _
  $region35: #{lstm_forward.1} parent=0 // pred_check_branch
    %758 = sbr.rel (0) target = $region37
  $region36: #{lstm_forward.1} parent=0 // pred_region
    _
  $region37: #{lstm_forward.1} parent=0 // pred_fallthru
    _

</llo_original>
